<compile_context>
chip_gen: v7x
topology: tpu7x:2x2x1
jax: 0.10.0
libtpu: 0.0.40
codegen_flags: <defaults>
</compile_context>

<pallas_src>
import jax
import jax.numpy as jnp
import numpy as np
from jax import lax
from jax.experimental import pallas as pl
from jax.experimental.pallas import tpu as pltpu

p = 20
d_model = p * 2          # 40
d_vocab = p + 1          # 21

TN_MAX = 1024            # output double-buffer at DM_PAD=128, f32 is ~1 MiB -> fits all gens


def _round_up(x, m):
    return (x + m - 1) // m * m


def _pick_tn(n_tokens):
    """Tokens per grid block.

    Big enough to amortize the ~0.35 us per-grid-step overhead (capped at TN_MAX),
    and — once there are >= 256 tokens — capped again so the grid has >= 2 blocks,
    letting the 'parallel' token axis shard across v7x's two TensorCores.
    """
    n_rounded = _round_up(max(n_tokens, 1), 128)
    tn = min(TN_MAX, n_rounded)
    if n_rounded >= 2 * 128:
        tn = min(tn, _round_up(n_rounded // 2, 128))
    return max(tn, 128)


def embed_kernel(tok_ref, wt_ref, o_ref):
    # tok_ref: (1, TN) int32 token ids, lane-dense             (VMEM, tiled over grid)
    # wt_ref : (DV_PAD, DM_PAD) padded W_E^T                   (VMEM, resident)
    # o_ref  : (TN, DM_PAD)                                    (VMEM, lane-dense)
    tok = tok_ref[...]                                  # (1, TN): ids on the lane axis
    tn = tok.shape[1]
    dv = wt_ref.shape[0]
    tok_col = jnp.transpose(tok)                        # (TN, 1): lane->sublane (XLU)
    vocab_iota = lax.broadcasted_iota(jnp.int32, (tn, dv), 1)
    onehot = (vocab_iota == tok_col).astype(wt_ref.dtype)    # exact 0/1, (TN, DV_PAD)
    o_ref[...] = jnp.dot(
        onehot, wt_ref[...], preferred_element_type=jnp.float32
    ).astype(o_ref.dtype)


def prepare_embed_table(W_E, dtype=None):
    """One-time prep (hoisted OUT of the per-step path).

    W_E: (d_model, d_vocab) -> zero-padded W_E^T of shape (DV_PAD, DM_PAD), with
    DM_PAD a multiple of 128 (lane-dense output stores) and DV_PAD a multiple of the
    sublane pack for `dtype` (8 for f32, 16 for bf16).  Padded rows are zero, so the
    one-hot matmul stays exact.
    """
    dtype = W_E.dtype if dtype is None else dtype
    dm, dv = W_E.shape
    dm_pad = _round_up(dm, 128)
    sublane = 8 * (4 // jnp.dtype(dtype).itemsize)
    dv_pad = _round_up(dv, sublane)
    W_T_padded = jnp.zeros((dv_pad, dm_pad), dtype).at[:dv, :dm].set(W_E.T.astype(dtype))
    return W_T_padded, dm


def embed(x, W_T_padded, dm, out_dtype=None):
    """x: (B, P) int ids, W_T_padded: (DV_PAD, DM_PAD) -> (B, P, d_model)."""
    B, P = x.shape
    N = B * P
    out_dtype = W_T_padded.dtype if out_dtype is None else out_dtype
    dv_pad, dm_pad = W_T_padded.shape

    TN = _pick_tn(N)
    n_pad = _round_up(N, TN)
    n_blocks = n_pad // TN

    tok = x.reshape(N).astype(jnp.int32)
    if n_pad != N:
        # TODO(synk): pre-pad token ids once outside the per-step path (or mask the
        # ragged last block in-kernel) to drop this per-call XLA dispatch.
        tok = jnp.pad(tok, (0, n_pad - N))
    tok = tok.reshape(n_blocks, TN)          # lane-dense: ids ride the 128-lane axis

    out = pl.pallas_call(
        embed_kernel,
        out_shape=jax.ShapeDtypeStruct((n_pad, dm_pad), out_dtype),
        grid_spec=pltpu.PrefetchScalarGridSpec(
            num_scalar_prefetch=0,
            grid=(n_blocks,),
            in_specs=[
                pl.BlockSpec((1, TN), lambda i: (i, 0)),           # lane-dense ids
                pl.BlockSpec((dv_pad, dm_pad), lambda i: (0, 0)),  # resident table
            ],
            out_specs=pl.BlockSpec((TN, dm_pad), lambda i: (i, 0)),
        ),
        compiler_params=pltpu.CompilerParams(
            dimension_semantics=("parallel",),   # token blocks shard across TCs (v7x)
        ),
    )(tok, W_T_padded)

    # TODO(synk): in production, let the consumer read the padded (n_pad, dm_pad)
    # slab directly (or fuse the gather) — this slice is an extra HBM->HBM copy of
    # roughly the kernel's own output size.
    return out[:N, :dm].reshape(B, P, dm)


if __name__ == "__main__":
    key = jax.random.PRNGKey(0)
    k_w, k_x = jax.random.split(key)

    # Deterministic init mirroring nn.Parameter(randn(d_model, d_vocab)/sqrt(d_model))
    W_E = (jax.random.normal(k_w, (d_model, d_vocab), dtype=jnp.float32)
           / np.sqrt(d_model)).astype(jnp.float32)

    batch = 2
    seq = p  # positions, matching the module's 'p'
    x = jax.random.randint(k_x, (batch, seq), 0, d_vocab, dtype=jnp.int32)

    # One-time table prep (transpose + pad hoisted out of the per-call path).
    # Keep f32 to match the PyTorch module; pass dtype=jnp.bfloat16 for a bf16 model.
    W_T_padded, dm = prepare_embed_table(W_E)

    out = embed(x, W_T_padded, dm)
    out = jax.block_until_ready(out)

    # Pure-JAX reference: out[b, p, d] = W_E[d, x[b, p]]
    ref = jnp.transpose(jnp.take(W_E, x, axis=1), (1, 2, 0))  # (B, P, d_model)

    assert out.shape == (batch, seq, d_model), out.shape
    np.testing.assert_allclose(np.asarray(out), np.asarray(ref), rtol=1e-5, atol=1e-5)

    print("KERNEL_OK")
</pallas_src>

<mosaic_0001>
module attributes {stable_mosaic.version = 11 : i64} {
  func.func @embed_kernel(%arg0: i32, %arg1: memref<1x128xi32, #tpu.memory_space<vmem>>, %arg2: memref<24x128xf32, #tpu.memory_space<vmem>>, %arg3: memref<128x128xf32, #tpu.memory_space<vmem>>) attributes {dimension_semantics = [#tpu.dimension_semantics<parallel>], iteration_bounds = array<i64: 1>, scalar_prefetch = 0 : i64, scratch_operands = 0 : i64, tpu.core_type = #tpu.core_type<tc>, window_params = [{transform_indices = @transform_0, window_bounds = array<i64: 1, 128>}, {pipeline_mode = #tpu.pipeline_mode<synchronous>, transform_indices = @transform_1, window_bounds = array<i64: 24, 128>}, {transform_indices = @transform_2, window_bounds = array<i64: 128, 128>}]} {
    %c0 = arith.constant 0 : index
    %c0_0 = arith.constant 0 : index
    %0 = vector.load %arg1[%c0, %c0_0] : memref<1x128xi32, #tpu.memory_space<vmem>>, vector<1x128xi32>
    %1 = tpu.transpose %0, [1, 0] : vector<1x128xi32> -> vector<128x1xi32>
    %2 = tpu.iota {dimensions = array<i32: 1>} : vector<128x24xi32>
    %3 = vector.broadcast %1 : vector<128x1xi32> to vector<128x24xi32>
    %4 = arith.cmpi eq, %2, %3 : vector<128x24xi32>
    %5 = arith.extui %4 : vector<128x24xi1> to vector<128x24xi32>
    %6 = arith.sitofp %5 : vector<128x24xi32> to vector<128x24xf32>
    %c0_1 = arith.constant 0 : index
    %c0_2 = arith.constant 0 : index
    %7 = vector.load %arg2[%c0_1, %c0_2] : memref<24x128xf32, #tpu.memory_space<vmem>>, vector<24x128xf32>
    %cst = arith.constant dense<0.000000e+00> : vector<128x128xf32>
    %8 = tpu.matmul %6, %7, %cst {dimension_numbers = #tpu.dot_dimension_numbers<[1], [0], [0], [1], [0, 0, 1, 1], [], []>} : vector<128x24xf32>, vector<24x128xf32>, vector<128x128xf32> -> vector<128x128xf32>
    %c0_3 = arith.constant 0 : index
    %c0_4 = arith.constant 0 : index
    %9 = vector.load %arg3[%c0_3, %c0_4] : memref<128x128xf32, #tpu.memory_space<vmem>>, vector<128x128xf32>
    tpu.vector_store %arg3[%c0_3, %c0_4], %8 {strides = array<i32>} : memref<128x128xf32, #tpu.memory_space<vmem>>, vector<128x128xf32>,
    return
  }
  func.func @transform_0(%arg0: i32) -> (i32, i32) {
    %c0_i32 = arith.constant 0 : i32
    %c0_i32_0 = arith.constant 0 : i32
    return %arg0, %c0_i32 : i32, i32
  }
  func.func @transform_1(%arg0: i32) -> (i32, i32) {
    %c0_i32 = arith.constant 0 : i32
    %c0_i32_0 = arith.constant 0 : i32
    %c0_i32_1 = arith.constant 0 : i32
    return %c0_i32, %c0_i32_0 : i32, i32
  }
  func.func @transform_2(%arg0: i32) -> (i32, i32) {
    %c0_i32 = arith.constant 0 : i32
    %c0_i32_0 = arith.constant 0 : i32
    return %arg0, %c0_i32 : i32, i32
  }
}

</mosaic_0001>

<llo_original>
// kernel: tpu_custom_call.1
$region0: #{tpu_custom_call.1}
  #allocation0 [shape = 'u32[]', space=smem, size = 0x4, offset = 0x4, fixed_abs, tag = 'smem constant byte address 0x4 - core index']
  #allocation1 [shape = 'u32[144,128]{1,0:T(1,128)}', space=vmem, size = 0x12000, scoped, tag = 'internal scratch']
  %s0 = inlined_call_operand.hbm [shape: s32[1,128], index: 0, kind: input, shape index: {}]
  %s1 = inlined_call_operand.hbm [shape: f32[24,128], index: 1, kind: input, shape index: {}]
  %s2 = inlined_call_operand.hbm [shape: f32[128,128], index: 2, kind: output, shape index: {}]
  %s3 = sld [smem:[#allocation0]]
  $region26: #{tpu_custom_call.1} parent=0
    _
  %s5 = ssub.s32 1, %s3
  %s6 = scalar_select 0, %s5, %s3
  $region1: #{tpu_custom_call.1} parent=0
    #allocation2 [shape = 'u8[512]{0}', space=vmem, size = 0x400, scoped, tag = 'input window, operand 0, single buffered']
    #allocation3 [shape = 's32[1]{0}', space=sflag, size = 0x4, scoped, tag = 'scoped memory for tpu_custom_call.1']
    #allocation4 [shape = 's32[1]{0}', space=sflag, size = 0x4, scoped, tag = 'scoped memory for tpu_custom_call.1']
    #allocation5 [shape = 'u8[12288]{0}', space=vmem, size = 0x3000, scoped, tag = 'input window, operand 1, single buffered']
    #allocation6 [shape = 's32[1]{0}', space=sflag, size = 0x4, scoped, tag = 'scoped memory for tpu_custom_call.1']
    #allocation7 [shape = 'u8[65536]{0}', space=vmem, size = 0x10000, scoped, tag = 'output window, operand 0, single buffered']
    %7 = vsyncpa [#allocation3], 0
    %8 = vsyncpa [#allocation6], 0
    %9 = vsyncpa [#allocation4], 0
    // Predicated region
    $region2: #{tpu_custom_call.1} parent=1 // pred_check
      _
    $region3: #{tpu_custom_call.1} parent=1 // pred_check_branch
      %11 = sbr.rel (0) target = $region5
    $region4: #{tpu_custom_call.1} parent=1 // pred_region
      %s13 = ssub.s32 16, 16
      %14 = vsyncadd [#allocation3], %s13
      %s16 = sshll.u32 [#allocation2], 4
      %s17 = int_to_ptr.vmem [resolvable:$true] %s16
      %19 = dma.hbm_to_vmem [thread:$0]  %s0, 16, %s17, [#allocation3]
    $region5: #{tpu_custom_call.1} parent=1 // pred_fallthru
      _
    // Predicated region
    $region6: #{tpu_custom_call.1} parent=1 // pred_check
      _
    $region7: #{tpu_custom_call.1} parent=1 // pred_check_branch
      %21 = sbr.rel (0) target = $region9
    $region8: #{tpu_custom_call.1} parent=1 // pred_region
      %s23 = ssub.s32 384, 384
      %24 = vsyncadd [#allocation6], %s23
      %s25 = sshll.u32 [#allocation5], 4
      %s26 = int_to_ptr.vmem [resolvable:$true] %s25
      %31 = dma.hbm_to_vmem [thread:$0]  %s1, 384, %s26, [#allocation6], 128, 128, 8
    $region9: #{tpu_custom_call.1} parent=1 // pred_fallthru
      _
    // Predicated region
    $region10: #{tpu_custom_call.1} parent=1 // pred_check
      _
    $region11: #{tpu_custom_call.1} parent=1 // pred_check_branch
      %33 = sbr.rel (0) target = $region13
    $region12: #{tpu_custom_call.1} parent=1 // pred_region
      %34 = dma.done [#allocation3], 16
    $region13: #{tpu_custom_call.1} parent=1 // pred_fallthru
      _
    // Predicated region
    $region14: #{tpu_custom_call.1} parent=1 // pred_check
      _
    $region15: #{tpu_custom_call.1} parent=1 // pred_check_branch
      %36 = sbr.rel (0) target = $region17
    $region16: #{tpu_custom_call.1} parent=1 // pred_region
      %37 = dma.done [#allocation6], 384
    $region17: #{tpu_custom_call.1} parent=1 // pred_fallthru
      _
    %v38 = vld [vmem:[#allocation2] sm:$0x1]
    %39 = vxpose.xlu0.b32.start [1/16] %v38, 128
    %40 = vxpose.xlu0.b32.cont [2/16] 0, 128
    %41 = vxpose.xlu0.b32.cont [3/16] 0, 128
    %42 = vxpose.xlu0.b32.cont [4/16] 0, 128
    %43 = vxpose.xlu0.b32.cont [5/16] 0, 128
    %44 = vxpose.xlu0.b32.cont [6/16] 0, 128
    %45 = vxpose.xlu0.b32.cont [7/16] 0, 128
    %46 = vxpose.xlu0.b32.cont [8/16] 0, 128
    %47 = vxpose.xlu0.b32.cont [9/16] 0, 128
    %48 = vxpose.xlu0.b32.cont [10/16] 0, 128
    %49 = vxpose.xlu0.b32.cont [11/16] 0, 128
    %50 = vxpose.xlu0.b32.cont [12/16] 0, 128
    %51 = vxpose.xlu0.b32.cont [13/16] 0, 128
    %52 = vxpose.xlu0.b32.cont [14/16] 0, 128
    %53 = vxpose.xlu0.b32.cont [15/16] 0, 128
    %54 = vxpose.xlu0.b32.end [16/16] 0, 128
    %v55 = vpop.trf.xlu0
    %v56 = vpop.trf.xlu0
    %v57 = vpop.trf.xlu0
    %v58 = vpop.trf.xlu0
    %v59 = vpop.trf.xlu0
    %v60 = vpop.trf.xlu0
    %v61 = vpop.trf.xlu0
    %v62 = vpop.trf.xlu0
    %v63 = vpop.trf.xlu0
    %v64 = vpop.trf.xlu0
    %v65 = vpop.trf.xlu0
    %v66 = vpop.trf.xlu0
    %v67 = vpop.trf.xlu0
    %v68 = vpop.trf.xlu0
    %v69 = vpop.trf.xlu0
    %v70 = vpop.trf.xlu0
    %v71 = vlaneseq
    %v72 = vand.u32 %v71, 127
    %73 = vset.pattern.permute.xlu0 0
    %74 = vperm.xlu0 %73, %v55
    %v75 = vpop.permute.xlu0 %74
    %76 = vset.pattern.permute.xlu0 0
    %77 = vperm.xlu0 %76, %v56
    %v78 = vpop.permute.xlu0 %77
    %79 = vset.pattern.permute.xlu0 0
    %80 = vperm.xlu0 %79, %v57
    %v81 = vpop.permute.xlu0 %80
    %82 = vset.pattern.permute.xlu0 0
    %83 = vperm.xlu0 %82, %v58
    %v84 = vpop.permute.xlu0 %83
    %85 = vset.pattern.permute.xlu0 0
    %86 = vperm.xlu0 %85, %v59
    %v87 = vpop.permute.xlu0 %86
    %88 = vset.pattern.permute.xlu0 0
    %89 = vperm.xlu0 %88, %v60
    %v90 = vpop.permute.xlu0 %89
    %91 = vset.pattern.permute.xlu0 0
    %92 = vperm.xlu0 %91, %v61
    %v93 = vpop.permute.xlu0 %92
    %94 = vset.pattern.permute.xlu0 0
    %95 = vperm.xlu0 %94, %v62
    %v96 = vpop.permute.xlu0 %95
    %97 = vset.pattern.permute.xlu0 0
    %98 = vperm.xlu0 %97, %v63
    %v99 = vpop.permute.xlu0 %98
    %100 = vset.pattern.permute.xlu0 0
    %101 = vperm.xlu0 %100, %v64
    %v102 = vpop.permute.xlu0 %101
    %103 = vset.pattern.permute.xlu0 0
    %104 = vperm.xlu0 %103, %v65
    %v105 = vpop.permute.xlu0 %104
    %106 = vset.pattern.permute.xlu0 0
    %107 = vperm.xlu0 %106, %v66
    %v108 = vpop.permute.xlu0 %107
    %109 = vset.pattern.permute.xlu0 0
    %110 = vperm.xlu0 %109, %v67
    %v111 = vpop.permute.xlu0 %110
    %112 = vset.pattern.permute.xlu0 0
    %113 = vperm.xlu0 %112, %v68
    %v114 = vpop.permute.xlu0 %113
    %115 = vset.pattern.permute.xlu0 0
    %116 = vperm.xlu0 %115, %v69
    %v117 = vpop.permute.xlu0 %116
    %118 = vset.pattern.permute.xlu0 0
    %119 = vperm.xlu0 %118, %v70
    %v120 = vpop.permute.xlu0 %119
    %vm121 = vcmp.eq.s32.totalorder %v72, %v75
    %vm122 = vcmp.eq.s32.totalorder %v72, %v78
    %vm123 = vcmp.eq.s32.totalorder %v72, %v81
    %vm124 = vcmp.eq.s32.totalorder %v72, %v84
    %vm125 = vcmp.eq.s32.totalorder %v72, %v87
    %vm126 = vcmp.eq.s32.totalorder %v72, %v90
    %vm127 = vcmp.eq.s32.totalorder %v72, %v93
    %vm128 = vcmp.eq.s32.totalorder %v72, %v96
    %vm129 = vcmp.eq.s32.totalorder %v72, %v99
    %vm130 = vcmp.eq.s32.totalorder %v72, %v102
    %vm131 = vcmp.eq.s32.totalorder %v72, %v105
    %vm132 = vcmp.eq.s32.totalorder %v72, %v108
    %vm133 = vcmp.eq.s32.totalorder %v72, %v111
    %vm134 = vcmp.eq.s32.totalorder %v72, %v114
    %vm135 = vcmp.eq.s32.totalorder %v72, %v117
    %vm136 = vcmp.eq.s32.totalorder %v72, %v120
    %v137 = vsel %vm121, 1, 0
    %v138 = vsel %vm122, 1, 0
    %v139 = vsel %vm123, 1, 0
    %v140 = vsel %vm124, 1, 0
    %v141 = vsel %vm125, 1, 0
    %v142 = vsel %vm126, 1, 0
    %v143 = vsel %vm127, 1, 0
    %v144 = vsel %vm128, 1, 0
    %v145 = vsel %vm129, 1, 0
    %v146 = vsel %vm130, 1, 0
    %v147 = vsel %vm131, 1, 0
    %v148 = vsel %vm132, 1, 0
    %v149 = vsel %vm133, 1, 0
    %v150 = vsel %vm134, 1, 0
    %v151 = vsel %vm135, 1, 0
    %v152 = vsel %vm136, 1, 0
    %v153 = vcvt.s32.f32 %v137
    %v154 = vcvt.s32.f32 %v138
    %v155 = vcvt.s32.f32 %v139
    %v156 = vcvt.s32.f32 %v140
    %v157 = vcvt.s32.f32 %v141
    %v158 = vcvt.s32.f32 %v142
    %v159 = vcvt.s32.f32 %v143
    %v160 = vcvt.s32.f32 %v144
    %v161 = vcvt.s32.f32 %v145
    %v162 = vcvt.s32.f32 %v146
    %v163 = vcvt.s32.f32 %v147
    %v164 = vcvt.s32.f32 %v148
    %v165 = vcvt.s32.f32 %v149
    %v166 = vcvt.s32.f32 %v150
    %v167 = vcvt.s32.f32 %v151
    %v168 = vcvt.s32.f32 %v152
    %v169 = vld [vmem:[#allocation5] sm:$0xff]
    %v170 = vld [vmem:[#allocation5 + $0x8] sm:$0xff]
    %v171 = vld [vmem:[#allocation5 + $0x10] sm:$0xff]
    %vm172 = vcmask 195584
    %v174 = vsel %vm172, %v153, 0
    %v177 = vsel %vm172, %v154, 0
    %v180 = vsel %vm172, %v155, 0
    %v183 = vsel %vm172, %v156, 0
    %v186 = vsel %vm172, %v157, 0
    %v189 = vsel %vm172, %v158, 0
    %v192 = vsel %vm172, %v159, 0
    %v195 = vsel %vm172, %v160, 0
    %v198 = vsel %vm172, %v161, 0
    %v201 = vsel %vm172, %v162, 0
    %v204 = vsel %vm172, %v163, 0
    %v207 = vsel %vm172, %v164, 0
    %v210 = vsel %vm172, %v165, 0
    %v213 = vsel %vm172, %v166, 0
    %v216 = vsel %vm172, %v167, 0
    %v219 = vsel %vm172, %v168, 0
    %221 = vmatprep.subr.mxu0 0.0
    %222 = vmatpush1.msra.mxu0 %v169
    %223 = vmatprep.subr.mxu0 0.0
    %224 = vmatpush1.msra.mxu0 %v170
    %225 = vmatprep.subr.mxu0 0.0
    %226 = vmatpush1.msra.mxu0 %v171
    %227 = vmatprep.subr.mxu0 0.0
    %228 = vmatpush1.msra.mxu0 0.0
    %229 = vmatprep.subr.mxu0 0.0
    %230 = vmatpush1.msra.mxu0 0.0
    %231 = vmatprep.subr.mxu0 0.0
    %232 = vmatpush1.msra.mxu0 0.0
    %233 = vmatprep.subr.mxu0 0.0
    %234 = vmatpush1.msra.mxu0 0.0
    %235 = vmatprep.subr.mxu0 0.0
    %236 = vmatpush1.msra.mxu0 0.0
    %237 = vmatprep.subr.mxu0 0.0
    %238 = vmatpush1.msra.mxu0 0.0
    %239 = vmatprep.subr.mxu0 0.0
    %240 = vmatpush1.msra.mxu0 0.0
    %241 = vmatprep.subr.mxu0 0.0
    %242 = vmatpush1.msra.mxu0 0.0
    %243 = vmatprep.subr.mxu0 0.0
    %244 = vmatpush1.msra.mxu0 0.0
    %245 = vmatprep.subr.mxu0 0.0
    %246 = vmatpush1.msra.mxu0 0.0
    %247 = vmatprep.subr.mxu0 0.0
    %248 = vmatpush1.msra.mxu0 0.0
    %249 = vmatprep.subr.mxu0 0.0
    %250 = vmatpush1.msra.mxu0 0.0
    %251 = vmatprep.subr.mxu0 0.0
    %252 = vmatpush1.msra.mxu0 0.0
    %253 = vmatprep.subr.mxu0 0.0
    %254 = vmatpush1.msra.mxu0 0.0
    %255 = vmatprep.subr.mxu0 0.0
    %256 = vmatpush1.msra.mxu0 0.0
    %257 = vmatprep.subr.mxu0 0.0
    %258 = vmatpush1.msra.mxu0 0.0
    %259 = vmatprep.subr.mxu0 0.0
    %260 = vmatpush1.msra.mxu0 0.0
    %261 = vmatprep.subr.mxu0 0.0
    %262 = vmatpush1.msra.mxu0 0.0
    %263 = vmatprep.subr.mxu0 0.0
    %264 = vmatpush1.msra.mxu0 0.0
    %265 = vmatprep.subr.mxu0 0.0
    %266 = vmatpush1.msra.mxu0 0.0
    %267 = vmatprep.subr.mxu0 0.0
    %268 = vmatpush1.msra.mxu0 0.0
    %269 = vmatprep.subr.mxu0 0.0
    %270 = vmatpush1.msra.mxu0 0.0
    %271 = vmatprep.subr.mxu0 0.0
    %272 = vmatpush1.msra.mxu0 0.0
    %273 = vmatprep.subr.mxu0 0.0
    %274 = vmatpush1.msra.mxu0 0.0
    %275 = vmatprep.subr.mxu0 0.0
    %276 = vmatpush1.msra.mxu0 0.0
    %277 = vmatprep.subr.mxu0 0.0
    %278 = vmatpush1.msra.mxu0 0.0
    %279 = vmatprep.subr.mxu0 0.0
    %280 = vmatpush1.msra.mxu0 0.0
    %281 = vmatprep.subr.mxu0 0.0
    %282 = vmatpush1.msra.mxu0 0.0
    %283 = vmatprep.subr.mxu0 0.0
    %284 = vmatpush1.msra.mxu0 0.0
    %285 = vmatprep.mubr.f32.mxu0 0.0
    %286 = vmatmul.mubr.f32.gmra.mrb[0].mxu0 %v174
    %v287 = vpop.f32.mrb[0].mxu0
    %v288 = vadd.f32 0.0, %v287
    %v289 = vpop.f32.mrb[0].mxu0
    %290 = vmatprep.mubr.f32.mxu0 0.0
    %291 = vmatmul.mubr.f32.gmra.mrb[0].mxu0 %v177
    %v292 = vpop.f32.mrb[0].mxu0
    %v293 = vadd.f32 0.0, %v292
    %v294 = vpop.f32.mrb[0].mxu0
    %295 = vmatprep.mubr.f32.mxu0 0.0
    %296 = vmatmul.mubr.f32.gmra.mrb[0].mxu0 %v180
    %v297 = vpop.f32.mrb[0].mxu0
    %v298 = vadd.f32 0.0, %v297
    %v299 = vpop.f32.mrb[0].mxu0
    %300 = vmatprep.mubr.f32.mxu0 0.0
    %301 = vmatmul.mubr.f32.gmra.mrb[0].mxu0 %v183
    %v302 = vpop.f32.mrb[0].mxu0
    %v303 = vadd.f32 0.0, %v302
    %v304 = vpop.f32.mrb[0].mxu0
    %305 = vmatprep.mubr.f32.mxu0 0.0
    %306 = vmatmul.mubr.f32.gmra.mrb[0].mxu0 %v186
    %v307 = vpop.f32.mrb[0].mxu0
    %v308 = vadd.f32 0.0, %v307
    %v309 = vpop.f32.mrb[0].mxu0
    %310 = vmatprep.mubr.f32.mxu0 0.0
    %311 = vmatmul.mubr.f32.gmra.mrb[0].mxu0 %v189
    %v312 = vpop.f32.mrb[0].mxu0
    %v313 = vadd.f32 0.0, %v312
    %v314 = vpop.f32.mrb[0].mxu0
    %315 = vmatprep.mubr.f32.mxu0 0.0
    %316 = vmatmul.mubr.f32.gmra.mrb[0].mxu0 %v192
    %v317 = vpop.f32.mrb[0].mxu0
    %v318 = vadd.f32 0.0, %v317
    %v319 = vpop.f32.mrb[0].mxu0
    %320 = vmatprep.mubr.f32.mxu0 0.0
    %321 = vmatmul.mubr.f32.gmra.mrb[0].mxu0 %v195
    %v322 = vpop.f32.mrb[0].mxu0
    %v323 = vadd.f32 0.0, %v322
    %v324 = vpop.f32.mrb[0].mxu0
    %325 = vmatprep.mubr.f32.mxu0 0.0
    %326 = vmatmul.mubr.f32.gmra.mrb[0].mxu0 %v198
    %v327 = vpop.f32.mrb[0].mxu0
    %v328 = vadd.f32 0.0, %v327
    %v329 = vpop.f32.mrb[0].mxu0
    %330 = vmatprep.mubr.f32.mxu0 0.0
    %331 = vmatmul.mubr.f32.gmra.mrb[0].mxu0 %v201
    %v332 = vpop.f32.mrb[0].mxu0
    %v333 = vadd.f32 0.0, %v332
    %v334 = vpop.f32.mrb[0].mxu0
    %335 = vmatprep.mubr.f32.mxu0 0.0
    %336 = vmatmul.mubr.f32.gmra.mrb[0].mxu0 %v204
    %v337 = vpop.f32.mrb[0].mxu0
    %v338 = vadd.f32 0.0, %v337
    %v339 = vpop.f32.mrb[0].mxu0
    %340 = vmatprep.mubr.f32.mxu0 0.0
    %341 = vmatmul.mubr.f32.gmra.mrb[0].mxu0 %v207
    %v342 = vpop.f32.mrb[0].mxu0
    %v343 = vadd.f32 0.0, %v342
    %v344 = vpop.f32.mrb[0].mxu0
    %345 = vmatprep.mubr.f32.mxu0 0.0
    %346 = vmatmul.mubr.f32.gmra.mrb[0].mxu0 %v210
    %v347 = vpop.f32.mrb[0].mxu0
    %v348 = vadd.f32 0.0, %v347
    %v349 = vpop.f32.mrb[0].mxu0
    %350 = vmatprep.mubr.f32.mxu0 0.0
    %351 = vmatmul.mubr.f32.gmra.mrb[0].mxu0 %v213
    %v352 = vpop.f32.mrb[0].mxu0
    %v353 = vadd.f32 0.0, %v352
    %v354 = vpop.f32.mrb[0].mxu0
    %355 = vmatprep.mubr.f32.mxu0 0.0
    %356 = vmatmul.mubr.f32.gmra.mrb[0].mxu0 %v216
    %v357 = vpop.f32.mrb[0].mxu0
    %v358 = vadd.f32 0.0, %v357
    %v359 = vpop.f32.mrb[0].mxu0
    %360 = vmatprep.mubr.f32.mxu0 0.0
    %361 = vmatmul.mubr.f32.gmra.mrb[0].mxu0 %v219
    %v362 = vpop.f32.mrb[0].mxu0
    %v363 = vadd.f32 0.0, %v362
    %v364 = vpop.f32.mrb[0].mxu0
    %365 = vdwg.mxu0
    %366 = vst [vmem:[#allocation7] sm:$0xff] %v288
    %367 = vst [vmem:[#allocation7 + $0x8] sm:$0xff] %v293
    %368 = vst [vmem:[#allocation7 + $0x10] sm:$0xff] %v298
    %369 = vst [vmem:[#allocation7 + $0x18] sm:$0xff] %v303
    %370 = vst [vmem:[#allocation7 + $0x20] sm:$0xff] %v308
    %371 = vst [vmem:[#allocation7 + $0x28] sm:$0xff] %v313
    %372 = vst [vmem:[#allocation7 + $0x30] sm:$0xff] %v318
    %373 = vst [vmem:[#allocation7 + $0x38] sm:$0xff] %v323
    %374 = vst [vmem:[#allocation7 + $0x40] sm:$0xff] %v328
    %375 = vst [vmem:[#allocation7 + $0x48] sm:$0xff] %v333
    %376 = vst [vmem:[#allocation7 + $0x50] sm:$0xff] %v338
    %377 = vst [vmem:[#allocation7 + $0x58] sm:$0xff] %v343
    %378 = vst [vmem:[#allocation7 + $0x60] sm:$0xff] %v348
    %379 = vst [vmem:[#allocation7 + $0x68] sm:$0xff] %v353
    %380 = vst [vmem:[#allocation7 + $0x70] sm:$0xff] %v358
    %381 = vst [vmem:[#allocation7 + $0x78] sm:$0xff] %v363
    // Predicated region
    $region18: #{tpu_custom_call.1} parent=1 // pred_check
      _
    $region19: #{tpu_custom_call.1} parent=1 // pred_check_branch
      %383 = sbr.rel (0) target = $region21
    $region20: #{tpu_custom_call.1} parent=1 // pred_region
      %s385 = ssub.s32 2048, 2048
      %386 = vsyncadd [#allocation4], %s385
      %s387 = sshll.u32 [#allocation7], 4
      %s388 = int_to_ptr.vmem [resolvable:$true] %s387
      %393 = dma.vmem_to_hbm [thread:$0]  %s388, 2048, %s2, [#allocation4], 128, 128, 8
    $region21: #{tpu_custom_call.1} parent=1 // pred_fallthru
      _
    // Predicated region
    $region22: #{tpu_custom_call.1} parent=1 // pred_check
      _
    $region23: #{tpu_custom_call.1} parent=1 // pred_check_branch
      %395 = sbr.rel (0) target = $region25
    $region24: #{tpu_custom_call.1} parent=1 // pred_region
      %396 = dma.done [#allocation4], 2048
    $region25: #{tpu_custom_call.1} parent=1 // pred_fallthru
      _
    %397 = vsyncpa [#allocation3], 1
    %398 = vsyncpa [#allocation6], 1
    %399 = vsyncpa [#allocation4], 1

</llo_original>
